<compile_context>
chip_gen: v7x
topology: tpu7x:2x2x1
jax: 0.10.0
libtpu: 0.0.40
codegen_flags: <defaults>
</compile_context>

<pallas_src>
import functools

import jax
import jax.numpy as jnp
from jax import lax
from jax.experimental import pallas as pl
from jax.experimental.pallas import tpu as pltpu


def _round_up(n, m):
    return ((n + m - 1) // m) * m


def _pad_axis(a, axis, target):
    cur = a.shape[axis]
    if cur == target:
        return a
    pad_width = [(0, 0)] * a.ndim
    pad_width[axis] = (0, target - cur)
    return jnp.pad(a, pad_width)


def _vmem_capacity_bytes():
    try:
        cap = getattr(pltpu.get_tpu_info(), "vmem_capacity_bytes", None)
        if cap:
            return int(cap)
    except Exception:
        pass
    return 64 * 1024 * 1024  # conservative fallback (v7x per-core VMEM)


def _pick_tk(hid_p, cap):
    """Largest multiple-of-128 chunk <= cap that evenly divides hid_p."""
    cap = max(128, (min(cap, hid_p) // 128) * 128)
    if hid_p <= cap:
        return hid_p
    for cand in range(cap, 127, -128):
        if hid_p % cand == 0:
            return cand
    return 128


def _pick_tm(vmem_budget, in_p, out_p, tk, x_itemsize, w_itemsize):
    """Largest row tile whose working set fits comfortably inside the VMEM budget."""
    weight_bytes = 2 * (in_p * tk + tk * out_p) * w_itemsize  # double-buffered chunks
    for cand in (1024, 512, 256, 128, 64, 32, 16):
        act_bytes = cand * (2 * in_p * x_itemsize       # x block (double-buffered)
                            + 2 * out_p * x_itemsize    # out block (double-buffered)
                            + out_p * 4                 # f32 accumulator scratch
                            + 2 * tk * 4)               # f32 hidden intermediate + slack
        if weight_bytes + act_bytes <= int(0.7 * vmem_budget):
            return cand
    return 16


def _mlp_block_kernel(x_ref, w1_ref, b1_ref, w2_ref, b2_ref, g_ref, beta_ref,
                      o_ref, acc_ref, *, eps, out_dim, n_pad):
    k = pl.program_id(1)

    @pl.when(k == 0)
    def _():
        acc_ref[...] = jnp.zeros_like(acc_ref)

    x = x_ref[...]
    # Feed the MXU narrow operands when weights are bf16 (residual stays f32).
    w1_is_bf16 = jnp.dtype(w1_ref.dtype) == jnp.dtype(jnp.bfloat16)
    x_mm = x.astype(jnp.bfloat16) if (w1_is_bf16 and x.dtype != jnp.bfloat16) else x

    # in_linear chunk + ReLU.   w1 chunk: (in_p, tk), b1 chunk: (1, tk).
    h = jnp.dot(x_mm, w1_ref[...], preferred_element_type=jnp.float32)
    h = h + b1_ref[...].astype(jnp.float32)
    h = jnp.maximum(h, 0.0)
    # TODO(synk): dropout is identity (eval mode); training mode would need
    # pltpu.prng_seed/prng_random_bits masking and 1/(1-p) scaling.

    # out_linear chunk, accumulated in f32.   w2 chunk: (tk, out_p).
    h = h.astype(w2_ref.dtype)
    acc_ref[...] += jnp.dot(h, w2_ref[...], preferred_element_type=jnp.float32)

    @pl.when(k == pl.num_programs(1) - 1)
    def _():
        y = acc_ref[...] + b2_ref[...].astype(jnp.float32)
        z = y + x.astype(jnp.float32)          # padded lanes of z are exactly 0
        inv_n = 1.0 / out_dim
        mean = jnp.sum(z, axis=-1, keepdims=True) * inv_n
        cen = z - mean
        sq = jnp.sum(cen * cen, axis=-1, keepdims=True)
        if n_pad:
            # Each zero-padded lane contributes (0 - mean)^2 to sq; remove analytically.
            sq = sq - n_pad * mean * mean
        var = sq * inv_n
        zn = cen * lax.rsqrt(var + eps)
        out = zn * g_ref[...].astype(jnp.float32) + beta_ref[...].astype(jnp.float32)
        o_ref[...] = out.astype(o_ref.dtype)


def mlp_block(x, params, *, tm=None, tk=512, eps=1e-5, vmem_limit_bytes=None):
    """x: [B, *, in_dim] -> [B, *, out_dim]  (residual requires in_dim == out_dim).

    Eval-mode forward: dropout is identity (no mask, no 1/(1-p) scaling).
    """
    w1, b1, w2, b2, gamma, beta = params
    in_dim = x.shape[-1]
    hidden_dim = w1.shape[1]
    out_dim = w2.shape[1]
    assert in_dim == out_dim, "residual requires in_dim == out_dim"

    orig_lead = x.shape[:-1]
    xf = x.reshape(-1, in_dim)
    n_rows = xf.shape[0]

    # Lane-dense feature dims (multiples of 128); zero padding keeps semantics.
    in_p = _round_up(in_dim, 128)
    hid_p = _round_up(hidden_dim, 128)
    out_p = _round_up(out_dim, 128)

    # Per-generation VMEM sizing (~0.78x physical; ~100 MiB v5e/v6e, ~50 MiB v7x).
    if vmem_limit_bytes is None:
        vmem_limit_bytes = int(0.78 * _vmem_capacity_bytes())

    tk_eff = _pick_tk(hid_p, tk)
    n_k = hid_p // tk_eff

    x_itemsize = jnp.dtype(x.dtype).itemsize
    w_itemsize = jnp.dtype(w1.dtype).itemsize
    if tm is None:
        tm = _pick_tm(vmem_limit_bytes, in_p, out_p, tk_eff, x_itemsize, w_itemsize)
    tm_eff = max(16, min(tm, _round_up(n_rows, 16)))  # sublane-legal for f32 & bf16
    n_i = pl.cdiv(n_rows, tm_eff)

    # Feature-dim padding only (no row pad/slice; Pallas masks the partial block).
    xf = _pad_axis(xf, 1, in_p)
    w1p = _pad_axis(_pad_axis(w1, 0, in_p), 1, hid_p)
    b1p = _pad_axis(b1, 1, hid_p)
    w2p = _pad_axis(_pad_axis(w2, 0, hid_p), 1, out_p)
    b2p = _pad_axis(b2, 1, out_p)
    gp = _pad_axis(gamma, 1, out_p)
    bp = _pad_axis(beta, 1, out_p)

    kernel = functools.partial(_mlp_block_kernel, eps=eps, out_dim=out_dim,
                               n_pad=out_p - out_dim)

    flops = 2 * n_rows * (in_p * hid_p + hid_p * out_p)
    bytes_accessed = (n_rows * (in_p + out_p) * x_itemsize
                      + n_i * (in_p * hid_p + hid_p * out_p) * w_itemsize
                      + (hid_p + 3 * out_p) * w_itemsize)
    cost = pl.CostEstimate(flops=flops, transcendentals=n_rows,
                           bytes_accessed=bytes_accessed)

    def build(use_single_buffer):
        def spec(shape, index_map, buffers=None):
            if use_single_buffer and buffers is not None and hasattr(pl, "Buffered"):
                try:
                    return pl.BlockSpec(shape, index_map,
                                        pipeline_mode=pl.Buffered(buffers))
                except TypeError:
                    pass
            return pl.BlockSpec(shape, index_map)

        # Weight chunks are grid-constant only when the hidden axis collapses.
        w_buf = 1 if n_k == 1 else None
        in_specs = [
            pl.BlockSpec((tm_eff, in_p), lambda i, k: (i, 0)),     # x rows
            spec((in_p, tk_eff), lambda i, k: (0, k), w_buf),      # w1 chunk
            spec((1, tk_eff), lambda i, k: (0, k), w_buf),         # b1 chunk
            spec((tk_eff, out_p), lambda i, k: (k, 0), w_buf),     # w2 chunk
            spec((1, out_p), lambda i, k: (0, 0), 1),              # b2
            spec((1, out_p), lambda i, k: (0, 0), 1),              # ln gamma
            spec((1, out_p), lambda i, k: (0, 0), 1),              # ln beta
        ]
        # TODO(synk): if profiling shows the x/out stream DMA exposed in the
        # mem-bound small-hidden case, sweep pipeline_mode=pl.Buffered(3) on x/out.
        return pl.pallas_call(
            kernel,
            out_shape=jax.ShapeDtypeStruct((n_rows, out_p), x.dtype),
            grid_spec=pltpu.PrefetchScalarGridSpec(
                num_scalar_prefetch=0,
                grid=(n_i, n_k),          # rows first (parallel), hidden reduction last
                in_specs=in_specs,
                out_specs=pl.BlockSpec((tm_eff, out_p), lambda i, k: (i, 0)),
                scratch_shapes=[pltpu.VMEM((tm_eff, out_p), jnp.float32)],
            ),
            compiler_params=pltpu.CompilerParams(
                dimension_semantics=("parallel", "arbitrary"),
                vmem_limit_bytes=vmem_limit_bytes),
            cost_estimate=cost,
        )

    args = (xf, w1p, b1p, w2p, b2p, gp, bp)
    try:
        out = build(True)(*args)
    except Exception:
        # Fallback if this JAX/Mosaic version rejects single-buffered pipeline_mode.
        out = build(False)(*args)

    if out_p != out_dim:
        out = out[:, :out_dim]
    return out.reshape(orig_lead + (out_dim,))


def init_params(key, in_dim, hidden_dim, out_dim, dtype=jnp.float32):
    """Deterministic synthetic init mirroring nn.Linear / nn.LayerNorm shapes."""
    k1, k2, k3, k4 = jax.random.split(key, 4)
    # PyTorch Linear weight is (out, in); we store the transpose (in, out).
    bound1 = 1.0 / (in_dim ** 0.5)
    w1 = jax.random.uniform(k1, (in_dim, hidden_dim), dtype, -bound1, bound1)
    b1 = jax.random.uniform(k2, (1, hidden_dim), dtype, -bound1, bound1)
    bound2 = 1.0 / (hidden_dim ** 0.5)
    w2 = jax.random.uniform(k3, (hidden_dim, out_dim), dtype, -bound2, bound2)
    b2 = jax.random.uniform(k4, (1, out_dim), dtype, -bound2, bound2)
    gamma = jnp.ones((1, out_dim), dtype)
    beta = jnp.zeros((1, out_dim), dtype)
    return w1, b1, w2, b2, gamma, beta


def mlp_block_ref(x, params, eps=1e-5):
    """Pure-JAX reference for validation (dropout = identity, eval mode)."""
    w1, b1, w2, b2, gamma, beta = params
    h = jnp.maximum(x @ w1 + b1[0], 0.0)
    y = h @ w2 + b2[0]
    z = y + x
    mean = jnp.mean(z, axis=-1, keepdims=True)
    var = jnp.mean((z - mean) ** 2, axis=-1, keepdims=True)
    return (z - mean) / jnp.sqrt(var + eps) * gamma[0] + beta[0]


if __name__ == "__main__":
    key = jax.random.PRNGKey(0)

    # Test 1: small dims — exercises lane padding (32 -> 128), single hidden chunk.
    B, S = 2, 8
    in_dim, hidden_dim, out_dim = 32, 64, 32      # residual => out_dim == in_dim
    kx, kp, key = jax.random.split(key, 3)
    x = jax.random.normal(kx, (B, S, in_dim), jnp.float32)
    params = init_params(kp, in_dim, hidden_dim, out_dim)
    out = jax.block_until_ready(mlp_block(x, params))
    ref = mlp_block_ref(x, params)
    assert out.shape == (B, S, out_dim)
    assert jnp.allclose(out, ref, atol=1e-4, rtol=1e-4), "mismatch vs reference (test 1)"

    # Test 2: hidden split (1024 -> 2 chunks of 512), partial last row block,
    # out_dim not a multiple of 128 (analytic variance-correction path).
    B2, S2 = 2, 10
    in_dim2, hidden_dim2, out_dim2 = 48, 1024, 48
    kx2, kp2, key = jax.random.split(key, 3)
    x2 = jax.random.normal(kx2, (B2, S2, in_dim2), jnp.float32)
    params2 = init_params(kp2, in_dim2, hidden_dim2, out_dim2)
    out2 = jax.block_until_ready(mlp_block(x2, params2, tk=512))
    ref2 = mlp_block_ref(x2, params2)
    assert out2.shape == (B2, S2, out_dim2)
    assert jnp.allclose(out2, ref2, atol=3e-3, rtol=3e-3), "mismatch vs reference (test 2)"

    print("KERNEL_OK")
</pallas_src>

<mosaic_0001>
module attributes {stable_mosaic.version = 11 : i64} {
  func.func @_mlp_block_kernel(%arg0: i32, %arg1: i32, %arg2: memref<16x128xf32, #tpu.memory_space<vmem>>, %arg3: memref<128x128xf32, #tpu.memory_space<vmem>>, %arg4: memref<1x128xf32, #tpu.memory_space<vmem>>, %arg5: memref<128x128xf32, #tpu.memory_space<vmem>>, %arg6: memref<1x128xf32, #tpu.memory_space<vmem>>, %arg7: memref<1x128xf32, #tpu.memory_space<vmem>>, %arg8: memref<1x128xf32, #tpu.memory_space<vmem>>, %arg9: memref<16x128xf32, #tpu.memory_space<vmem>>, %arg10: memref<16x128xf32, #tpu.memory_space<vmem>>) attributes {dimension_semantics = [#tpu.dimension_semantics<parallel>, #tpu.dimension_semantics<arbitrary>], iteration_bounds = array<i64: 1, 1>, scalar_prefetch = 0 : i64, scratch_operands = 1 : i64, tpu.core_type = #tpu.core_type<tc>, window_params = [{transform_indices = @transform_0, window_bounds = array<i64: 16, 128>}, {pipeline_mode = #tpu.pipeline_mode<synchronous>, transform_indices = @transform_1, window_bounds = array<i64: 128, 128>}, {pipeline_mode = #tpu.pipeline_mode<synchronous>, transform_indices = @transform_2, window_bounds = array<i64: 1, 128>}, {pipeline_mode = #tpu.pipeline_mode<synchronous>, transform_indices = @transform_3, window_bounds = array<i64: 128, 128>}, {pipeline_mode = #tpu.pipeline_mode<synchronous>, transform_indices = @transform_4, window_bounds = array<i64: 1, 128>}, {pipeline_mode = #tpu.pipeline_mode<synchronous>, transform_indices = @transform_5, window_bounds = array<i64: 1, 128>}, {pipeline_mode = #tpu.pipeline_mode<synchronous>, transform_indices = @transform_6, window_bounds = array<i64: 1, 128>}, {transform_indices = @transform_7, window_bounds = array<i64: 16, 128>}]} {
    %c0_i32 = arith.constant 0 : i32
    %0 = arith.cmpi eq, %arg1, %c0_i32 : i32
    %1 = arith.extui %0 : i1 to i32
    %c0_i32_0 = arith.constant 0 : i32
    %2 = arith.cmpi ne, %1, %c0_i32_0 : i32
    scf.if %2 {
      %cst_16 = arith.constant 0.000000e+00 : f32
      %19 = vector.broadcast %cst_16 : f32 to vector<16x128xf32>
      %c0_17 = arith.constant 0 : index
      %c0_18 = arith.constant 0 : index
      %20 = vector.load %arg10[%c0_17, %c0_18] : memref<16x128xf32, #tpu.memory_space<vmem>>, vector<16x128xf32>
      tpu.vector_store %arg10[%c0_17, %c0_18], %19 {strides = array<i32>} : memref<16x128xf32, #tpu.memory_space<vmem>>, vector<16x128xf32>,
    } else {
    }
    %c0 = arith.constant 0 : index
    %c0_1 = arith.constant 0 : index
    %3 = vector.load %arg2[%c0, %c0_1] : memref<16x128xf32, #tpu.memory_space<vmem>>, vector<16x128xf32>
    %c0_2 = arith.constant 0 : index
    %c0_3 = arith.constant 0 : index
    %4 = vector.load %arg3[%c0_2, %c0_3] : memref<128x128xf32, #tpu.memory_space<vmem>>, vector<128x128xf32>
    %cst = arith.constant dense<0.000000e+00> : vector<16x128xf32>
    %5 = tpu.matmul %3, %4, %cst {dimension_numbers = #tpu.dot_dimension_numbers<[1], [0], [0], [1], [0, 0, 1, 1], [], []>} : vector<16x128xf32>, vector<128x128xf32>, vector<16x128xf32> -> vector<16x128xf32>
    %c0_4 = arith.constant 0 : index
    %c0_5 = arith.constant 0 : index
    %6 = vector.load %arg4[%c0_4, %c0_5] : memref<1x128xf32, #tpu.memory_space<vmem>>, vector<1x128xf32>
    %7 = vector.broadcast %6 : vector<1x128xf32> to vector<16x128xf32>
    %8 = arith.addf %5, %7 : vector<16x128xf32>
    %cst_6 = arith.constant 0.000000e+00 : f32
    %9 = vector.broadcast %cst_6 : f32 to vector<16x128xf32>
    %10 = arith.maximumf %8, %9 : vector<16x128xf32>
    %c0_7 = arith.constant 0 : index
    %c0_8 = arith.constant 0 : index
    %11 = vector.load %arg10[%c0_7, %c0_8] : memref<16x128xf32, #tpu.memory_space<vmem>>, vector<16x128xf32>
    %c0_9 = arith.constant 0 : index
    %c0_10 = arith.constant 0 : index
    %12 = vector.load %arg5[%c0_9, %c0_10] : memref<128x128xf32, #tpu.memory_space<vmem>>, vector<128x128xf32>
    %cst_11 = arith.constant dense<0.000000e+00> : vector<16x128xf32>
    %13 = tpu.matmul %10, %12, %cst_11 {dimension_numbers = #tpu.dot_dimension_numbers<[1], [0], [0], [1], [0, 0, 1, 1], [], []>} : vector<16x128xf32>, vector<128x128xf32>, vector<16x128xf32> -> vector<16x128xf32>
    %14 = arith.addf %11, %13 : vector<16x128xf32>
    %c0_12 = arith.constant 0 : index
    %c0_13 = arith.constant 0 : index
    %15 = vector.load %arg10[%c0_12, %c0_13] : memref<16x128xf32, #tpu.memory_space<vmem>>, vector<16x128xf32>
    tpu.vector_store %arg10[%c0_12, %c0_13], %14 {strides = array<i32>} : memref<16x128xf32, #tpu.memory_space<vmem>>, vector<16x128xf32>,
    %c0_i32_14 = arith.constant 0 : i32
    %16 = arith.cmpi eq, %arg1, %c0_i32_14 : i32
    %17 = arith.extui %16 : i1 to i32
    %c0_i32_15 = arith.constant 0 : i32
    %18 = arith.cmpi ne, %17, %c0_i32_15 : i32
    scf.if %18 {
      %c0_16 = arith.constant 0 : index
      %c0_17 = arith.constant 0 : index
      %19 = vector.load %arg10[%c0_16, %c0_17] : memref<16x128xf32, #tpu.memory_space<vmem>>, vector<16x128xf32>
      %c0_18 = arith.constant 0 : index
      %c0_19 = arith.constant 0 : index
      %20 = vector.load %arg6[%c0_18, %c0_19] : memref<1x128xf32, #tpu.memory_space<vmem>>, vector<1x128xf32>
      %21 = vector.broadcast %20 : vector<1x128xf32> to vector<16x128xf32>
      %22 = arith.addf %19, %21 : vector<16x128xf32>
      %23 = arith.addf %22, %3 : vector<16x128xf32>
      %cst_20 = arith.constant dense<0.000000e+00> : vector<16xf32>
      %24 = vector.multi_reduction <add>, %23, %cst_20 [1] : vector<16x128xf32> to vector<16xf32>
      %25 = vector.shape_cast %24 : vector<16xf32> to vector<16x1xf32>
      %cst_21 = arith.constant 3.125000e-02 : f32
      %26 = vector.broadcast %cst_21 : f32 to vector<16x1xf32>
      %27 = arith.mulf %25, %26 : vector<16x1xf32>
      %28 = vector.broadcast %27 : vector<16x1xf32> to vector<16x128xf32>
      %29 = arith.subf %23, %28 : vector<16x128xf32>
      %30 = arith.mulf %29, %29 : vector<16x128xf32>
      %cst_22 = arith.constant dense<0.000000e+00> : vector<16xf32>
      %31 = vector.multi_reduction <add>, %30, %cst_22 [1] : vector<16x128xf32> to vector<16xf32>
      %32 = vector.shape_cast %31 : vector<16xf32> to vector<16x1xf32>
      %cst_23 = arith.constant 9.600000e+01 : f32
      %33 = vector.broadcast %cst_23 : f32 to vector<16x1xf32>
      %34 = arith.mulf %33, %27 : vector<16x1xf32>
      %35 = arith.mulf %34, %27 : vector<16x1xf32>
      %36 = arith.subf %32, %35 : vector<16x1xf32>
      %cst_24 = arith.constant 3.125000e-02 : f32
      %37 = vector.broadcast %cst_24 : f32 to vector<16x1xf32>
      %38 = arith.mulf %36, %37 : vector<16x1xf32>
      %cst_25 = arith.constant 9.99999974E-6 : f32
      %39 = vector.broadcast %cst_25 : f32 to vector<16x1xf32>
      %40 = arith.addf %38, %39 : vector<16x1xf32>
      %41 = math.rsqrt %40 : vector<16x1xf32>
      %42 = vector.broadcast %41 : vector<16x1xf32> to vector<16x128xf32>
      %43 = arith.mulf %29, %42 : vector<16x128xf32>
      %c0_26 = arith.constant 0 : index
      %c0_27 = arith.constant 0 : index
      %44 = vector.load %arg7[%c0_26, %c0_27] : memref<1x128xf32, #tpu.memory_space<vmem>>, vector<1x128xf32>
      %45 = vector.broadcast %44 : vector<1x128xf32> to vector<16x128xf32>
      %46 = arith.mulf %43, %45 : vector<16x128xf32>
      %c0_28 = arith.constant 0 : index
      %c0_29 = arith.constant 0 : index
      %47 = vector.load %arg8[%c0_28, %c0_29] : memref<1x128xf32, #tpu.memory_space<vmem>>, vector<1x128xf32>
      %48 = vector.broadcast %47 : vector<1x128xf32> to vector<16x128xf32>
      %49 = arith.addf %46, %48 : vector<16x128xf32>
      %c0_30 = arith.constant 0 : index
      %c0_31 = arith.constant 0 : index
      %50 = vector.load %arg9[%c0_30, %c0_31] : memref<16x128xf32, #tpu.memory_space<vmem>>, vector<16x128xf32>
      tpu.vector_store %arg9[%c0_30, %c0_31], %49 {strides = array<i32>} : memref<16x128xf32, #tpu.memory_space<vmem>>, vector<16x128xf32>,
    } else {
    }
    return
  }
  func.func @transform_0(%arg0: i32, %arg1: i32) -> (i32, i32) {
    %c0_i32 = arith.constant 0 : i32
    %c0_i32_0 = arith.constant 0 : i32
    return %arg0, %c0_i32 : i32, i32
  }
  func.func @transform_1(%arg0: i32, %arg1: i32) -> (i32, i32) {
    %c0_i32 = arith.constant 0 : i32
    %c0_i32_0 = arith.constant 0 : i32
    return %c0_i32, %arg1 : i32, i32
  }
  func.func @transform_2(%arg0: i32, %arg1: i32) -> (i32, i32) {
    %c0_i32 = arith.constant 0 : i32
    %c0_i32_0 = arith.constant 0 : i32
    return %c0_i32, %arg1 : i32, i32
  }
  func.func @transform_3(%arg0: i32, %arg1: i32) -> (i32, i32) {
    %c0_i32 = arith.constant 0 : i32
    %c0_i32_0 = arith.constant 0 : i32
    return %arg1, %c0_i32 : i32, i32
  }
  func.func @transform_4(%arg0: i32, %arg1: i32) -> (i32, i32) {
    %c0_i32 = arith.constant 0 : i32
    %c0_i32_0 = arith.constant 0 : i32
    %c0_i32_1 = arith.constant 0 : i32
    return %c0_i32, %c0_i32_0 : i32, i32
  }
  func.func @transform_5(%arg0: i32, %arg1: i32) -> (i32, i32) {
    %c0_i32 = arith.constant 0 : i32
    %c0_i32_0 = arith.constant 0 : i32
    %c0_i32_1 = arith.constant 0 : i32
    return %c0_i32, %c0_i32_0 : i32, i32
  }
  func.func @transform_6(%arg0: i32, %arg1: i32) -> (i32, i32) {
    %c0_i32 = arith.constant 0 : i32
    %c0_i32_0 = arith.constant 0 : i32
    %c0_i32_1 = arith.constant 0 : i32
    return %c0_i32, %c0_i32_0 : i32, i32
  }
  func.func @transform_7(%arg0: i32, %arg1: i32) -> (i32, i32) {
    %c0_i32 = arith.constant 0 : i32
    %c0_i32_0 = arith.constant 0 : i32
    return %arg0, %c0_i32 : i32, i32
  }
}

module attributes {stable_mosaic.version = 11 : i64} {
  func.func @_mlp_block_kernel(%arg0: i32, %arg1: i32, %arg2: memref<16x128xf32, #tpu.memory_space<vmem>>, %arg3: memref<128x128xf32, #tpu.memory_space<vmem>>, %arg4: memref<1x128xf32, #tpu.memory_space<vmem>>, %arg5: memref<128x128xf32, #tpu.memory_space<vmem>>, %arg6: memref<1x128xf32, #tpu.memory_space<vmem>>, %arg7: memref<1x128xf32, #tpu.memory_space<vmem>>, %arg8: memref<1x128xf32, #tpu.memory_space<vmem>>, %arg9: memref<16x128xf32, #tpu.memory_space<vmem>>, %arg10: memref<16x128xf32, #tpu.memory_space<vmem>>) attributes {dimension_semantics = [#tpu.dimension_semantics<parallel>, #tpu.dimension_semantics<arbitrary>], iteration_bounds = array<i64: 1, 1>, scalar_prefetch = 0 : i64, scratch_operands = 1 : i64, tpu.core_type = #tpu.core_type<tc>, window_params = [{transform_indices = @transform_0, window_bounds = array<i64: 16, 128>}, {transform_indices = @transform_1, window_bounds = array<i64: 128, 128>}, {transform_indices = @transform_2, window_bounds = array<i64: 1, 128>}, {transform_indices = @transform_3, window_bounds = array<i64: 128, 128>}, {pipeline_mode = #tpu.pipeline_mode<synchronous>, transform_indices = @transform_4, window_bounds = array<i64: 1, 128>}, {pipeline_mode = #tpu.pipeline_mode<synchronous>, transform_indices = @transform_5, window_bounds = array<i64: 1, 128>}, {pipeline_mode = #tpu.pipeline_mode<synchronous>, transform_indices = @transform_6, window_bounds = array<i64: 1, 128>}, {transform_indices = @transform_7, window_bounds = array<i64: 16, 128>}]} {
    %c0_i32 = arith.constant 0 : i32
    %0 = arith.cmpi eq, %arg1, %c0_i32 : i32
    %1 = arith.extui %0 : i1 to i32
    %c0_i32_0 = arith.constant 0 : i32
    %2 = arith.cmpi ne, %1, %c0_i32_0 : i32
    scf.if %2 {
      %cst_16 = arith.constant 0.000000e+00 : f32
      %19 = vector.broadcast %cst_16 : f32 to vector<16x128xf32>
      %c0_17 = arith.constant 0 : index
      %c0_18 = arith.constant 0 : index
      %20 = vector.load %arg10[%c0_17, %c0_18] : memref<16x128xf32, #tpu.memory_space<vmem>>, vector<16x128xf32>
      tpu.vector_store %arg10[%c0_17, %c0_18], %19 {strides = array<i32>} : memref<16x128xf32, #tpu.memory_space<vmem>>, vector<16x128xf32>,
    } else {
    }
    %c0 = arith.constant 0 : index
    %c0_1 = arith.constant 0 : index
    %3 = vector.load %arg2[%c0, %c0_1] : memref<16x128xf32, #tpu.memory_space<vmem>>, vector<16x128xf32>
    %c0_2 = arith.constant 0 : index
    %c0_3 = arith.constant 0 : index
    %4 = vector.load %arg3[%c0_2, %c0_3] : memref<128x128xf32, #tpu.memory_space<vmem>>, vector<128x128xf32>
    %cst = arith.constant dense<0.000000e+00> : vector<16x128xf32>
    %5 = tpu.matmul %3, %4, %cst {dimension_numbers = #tpu.dot_dimension_numbers<[1], [0], [0], [1], [0, 0, 1, 1], [], []>} : vector<16x128xf32>, vector<128x128xf32>, vector<16x128xf32> -> vector<16x128xf32>
    %c0_4 = arith.constant 0 : index
    %c0_5 = arith.constant 0 : index
    %6 = vector.load %arg4[%c0_4, %c0_5] : memref<1x128xf32, #tpu.memory_space<vmem>>, vector<1x128xf32>
    %7 = vector.broadcast %6 : vector<1x128xf32> to vector<16x128xf32>
    %8 = arith.addf %5, %7 : vector<16x128xf32>
    %cst_6 = arith.constant 0.000000e+00 : f32
    %9 = vector.broadcast %cst_6 : f32 to vector<16x128xf32>
    %10 = arith.maximumf %8, %9 : vector<16x128xf32>
    %c0_7 = arith.constant 0 : index
    %c0_8 = arith.constant 0 : index
    %11 = vector.load %arg10[%c0_7, %c0_8] : memref<16x128xf32, #tpu.memory_space<vmem>>, vector<16x128xf32>
    %c0_9 = arith.constant 0 : index
    %c0_10 = arith.constant 0 : index
    %12 = vector.load %arg5[%c0_9, %c0_10] : memref<128x128xf32, #tpu.memory_space<vmem>>, vector<128x128xf32>
    %cst_11 = arith.constant dense<0.000000e+00> : vector<16x128xf32>
    %13 = tpu.matmul %10, %12, %cst_11 {dimension_numbers = #tpu.dot_dimension_numbers<[1], [0], [0], [1], [0, 0, 1, 1], [], []>} : vector<16x128xf32>, vector<128x128xf32>, vector<16x128xf32> -> vector<16x128xf32>
    %14 = arith.addf %11, %13 : vector<16x128xf32>
    %c0_12 = arith.constant 0 : index
    %c0_13 = arith.constant 0 : index
    %15 = vector.load %arg10[%c0_12, %c0_13] : memref<16x128xf32, #tpu.memory_space<vmem>>, vector<16x128xf32>
    tpu.vector_store %arg10[%c0_12, %c0_13], %14 {strides = array<i32>} : memref<16x128xf32, #tpu.memory_space<vmem>>, vector<16x128xf32>,
    %c0_i32_14 = arith.constant 0 : i32
    %16 = arith.cmpi eq, %arg1, %c0_i32_14 : i32
    %17 = arith.extui %16 : i1 to i32
    %c0_i32_15 = arith.constant 0 : i32
    %18 = arith.cmpi ne, %17, %c0_i32_15 : i32
    scf.if %18 {
      %c0_16 = arith.constant 0 : index
      %c0_17 = arith.constant 0 : index
      %19 = vector.load %arg10[%c0_16, %c0_17] : memref<16x128xf32, #tpu.memory_space<vmem>>, vector<16x128xf32>
      %c0_18 = arith.constant 0 : index
      %c0_19 = arith.constant 0 : index
      %20 = vector.load %arg6[%c0_18, %c0_19] : memref<1x128xf32, #tpu.memory_space<vmem>>, vector<1x128xf32>
      %21 = vector.broadcast %20 : vector<1x128xf32> to vector<16x128xf32>
      %22 = arith.addf %19, %21 : vector<16x128xf32>
      %23 = arith.addf %22, %3 : vector<16x128xf32>
      %cst_20 = arith.constant dense<0.000000e+00> : vector<16xf32>
      %24 = vector.multi_reduction <add>, %23, %cst_20 [1] : vector<16x128xf32> to vector<16xf32>
      %25 = vector.shape_cast %24 : vector<16xf32> to vector<16x1xf32>
      %cst_21 = arith.constant 3.125000e-02 : f32
      %26 = vector.broadcast %cst_21 : f32 to vector<16x1xf32>
      %27 = arith.mulf %25, %26 : vector<16x1xf32>
      %28 = vector.broadcast %27 : vector<16x1xf32> to vector<16x128xf32>
      %29 = arith.subf %23, %28 : vector<16x128xf32>
      %30 = arith.mulf %29, %29 : vector<16x128xf32>
      %cst_22 = arith.constant dense<0.000000e+00> : vector<16xf32>
      %31 = vector.multi_reduction <add>, %30, %cst_22 [1] : vector<16x128xf32> to vector<16xf32>
      %32 = vector.shape_cast %31 : vector<16xf32> to vector<16x1xf32>
      %cst_23 = arith.constant 9.600000e+01 : f32
      %33 = vector.broadcast %cst_23 : f32 to vector<16x1xf32>
      %34 = arith.mulf %33, %27 : vector<16x1xf32>
      %35 = arith.mulf %34, %27 : vector<16x1xf32>
      %36 = arith.subf %32, %35 : vector<16x1xf32>
      %cst_24 = arith.constant 3.125000e-02 : f32
      %37 = vector.broadcast %cst_24 : f32 to vector<16x1xf32>
      %38 = arith.mulf %36, %37 : vector<16x1xf32>
      %cst_25 = arith.constant 9.99999974E-6 : f32
      %39 = vector.broadcast %cst_25 : f32 to vector<16x1xf32>
      %40 = arith.addf %38, %39 : vector<16x1xf32>
      %41 = math.rsqrt %40 : vector<16x1xf32>
      %42 = vector.broadcast %41 : vector<16x1xf32> to vector<16x128xf32>
      %43 = arith.mulf %29, %42 : vector<16x128xf32>
      %c0_26 = arith.constant 0 : index
      %c0_27 = arith.constant 0 : index
      %44 = vector.load %arg7[%c0_26, %c0_27] : memref<1x128xf32, #tpu.memory_space<vmem>>, vector<1x128xf32>
      %45 = vector.broadcast %44 : vector<1x128xf32> to vector<16x128xf32>
      %46 = arith.mulf %43, %45 : vector<16x128xf32>
      %c0_28 = arith.constant 0 : index
      %c0_29 = arith.constant 0 : index
      %47 = vector.load %arg8[%c0_28, %c0_29] : memref<1x128xf32, #tpu.memory_space<vmem>>, vector<1x128xf32>
      %48 = vector.broadcast %47 : vector<1x128xf32> to vector<16x128xf32>
      %49 = arith.addf %46, %48 : vector<16x128xf32>
      %c0_30 = arith.constant 0 : index
      %c0_31 = arith.constant 0 : index
      %50 = vector.load %arg9[%c0_30, %c0_31] : memref<16x128xf32, #tpu.memory_space<vmem>>, vector<16x128xf32>
      tpu.vector_store %arg9[%c0_30, %c0_31], %49 {strides = array<i32>} : memref<16x128xf32, #tpu.memory_space<vmem>>, vector<16x128xf32>,
    } else {
    }
    return
  }
  func.func @transform_0(%arg0: i32, %arg1: i32) -> (i32, i32) {
    %c0_i32 = arith.constant 0 : i32
    %c0_i32_0 = arith.constant 0 : i32
    return %arg0, %c0_i32 : i32, i32
  }
  func.func @transform_1(%arg0: i32, %arg1: i32) -> (i32, i32) {
    %c0_i32 = arith.constant 0 : i32
    %c0_i32_0 = arith.constant 0 : i32
    return %c0_i32, %arg1 : i32, i32
  }
  func.func @transform_2(%arg0: i32, %arg1: i32) -> (i32, i32) {
    %c0_i32 = arith.constant 0 : i32
    %c0_i32_0 = arith.constant 0 : i32
    return %c0_i32, %arg1 : i32, i32
  }
  func.func @transform_3(%arg0: i32, %arg1: i32) -> (i32, i32) {
    %c0_i32 = arith.constant 0 : i32
    %c0_i32_0 = arith.constant 0 : i32
    return %arg1, %c0_i32 : i32, i32
  }
  func.func @transform_4(%arg0: i32, %arg1: i32) -> (i32, i32) {
    %c0_i32 = arith.constant 0 : i32
    %c0_i32_0 = arith.constant 0 : i32
    %c0_i32_1 = arith.constant 0 : i32
    return %c0_i32, %c0_i32_0 : i32, i32
  }
  func.func @transform_5(%arg0: i32, %arg1: i32) -> (i32, i32) {
    %c0_i32 = arith.constant 0 : i32
    %c0_i32_0 = arith.constant 0 : i32
    %c0_i32_1 = arith.constant 0 : i32
    return %c0_i32, %c0_i32_0 : i32, i32
  }
  func.func @transform_6(%arg0: i32, %arg1: i32) -> (i32, i32) {
    %c0_i32 = arith.constant 0 : i32
    %c0_i32_0 = arith.constant 0 : i32
    %c0_i32_1 = arith.constant 0 : i32
    return %c0_i32, %c0_i32_0 : i32, i32
  }
  func.func @transform_7(%arg0: i32, %arg1: i32) -> (i32, i32) {
    %c0_i32 = arith.constant 0 : i32
    %c0_i32_0 = arith.constant 0 : i32
    return %arg0, %c0_i32 : i32, i32
  }
}

</mosaic_0001>

<llo_original>
// kernel: tpu_custom_call.1
$region0: #{tpu_custom_call.1}
  #allocation0 [shape = 'u32[]', space=smem, size = 0x4, offset = 0x4, fixed_abs, tag = 'smem constant byte address 0x4 - core index']
  #allocation1 [shape = 'u32[144,128]{1,0:T(1,128)}', space=vmem, size = 0x12000, scoped, tag = 'internal scratch']
  #allocation2 [shape = 'f32[16,128]{1,0:T(8,128)}', space=vmem, size = 0x2000, scoped, tag = 'scratch operand']
  %s0 = inlined_call_operand.hbm [shape: f32[16,128], index: 0, kind: input, shape index: {}]
  %s1 = inlined_call_operand.hbm [shape: f32[128,128], index: 1, kind: input, shape index: {}]
  %s2 = inlined_call_operand.vmem [shape: f32[1,128], index: 2, kind: input, shape index: {}]
  %s3 = inlined_call_operand.hbm [shape: f32[128,128], index: 3, kind: input, shape index: {}]
  %s4 = inlined_call_operand.vmem [shape: f32[1,128], index: 4, kind: input, shape index: {}]
  %s5 = inlined_call_operand.vmem [shape: f32[1,128], index: 5, kind: input, shape index: {}]
  %s6 = inlined_call_operand.vmem [shape: f32[1,128], index: 6, kind: input, shape index: {}]
  %s7 = inlined_call_operand.hbm [shape: f32[16,128], index: 7, kind: output, shape index: {}]
  %s8 = sld [smem:[#allocation0]]
  $region58: #{tpu_custom_call.1} parent=0
    _
  %s10 = ssub.s32 1, %s8
  %s11 = scalar_select 0, %s10, %s8
  $region1: #{tpu_custom_call.1} parent=0
    #allocation3 [shape = 'u8[8192]{0}', space=vmem, size = 0x2000, scoped, tag = 'input window, operand 0, single buffered']
    #allocation4 [shape = 's32[1]{0}', space=sflag, size = 0x4, scoped, tag = 'scoped memory for tpu_custom_call.1']
    #allocation5 [shape = 's32[1]{0}', space=sflag, size = 0x4, scoped, tag = 'scoped memory for tpu_custom_call.1']
    #allocation6 [shape = 'u8[65536]{0}', space=vmem, size = 0x10000, scoped, tag = 'input window, operand 1, single buffered']
    #allocation7 [shape = 's32[1]{0}', space=sflag, size = 0x4, scoped, tag = 'scoped memory for tpu_custom_call.1']
    #allocation8 [shape = 'u8[65536]{0}', space=vmem, size = 0x10000, scoped, tag = 'input window, operand 3, single buffered']
    #allocation9 [shape = 'u8[8192]{0}', space=vmem, size = 0x2000, scoped, tag = 'output window, operand 0, single buffered']
    %12 = vsyncpa [#allocation4], 0
    %13 = vsyncpa [#allocation7], 0
    %14 = vsyncpa [#allocation5], 0
    // Predicated region
    $region2: #{tpu_custom_call.1} parent=1 // pred_check
      _
    $region3: #{tpu_custom_call.1} parent=1 // pred_check_branch
      %16 = sbr.rel (0) target = $region5
    $region4: #{tpu_custom_call.1} parent=1 // pred_region
      %s18 = ssub.s32 256, 256
      %19 = vsyncadd [#allocation4], %s18
      %s20 = sshll.u32 [#allocation3], 4
      %s21 = int_to_ptr.vmem [resolvable:$true] %s20
      %26 = dma.hbm_to_vmem [thread:$0]  %s0, 256, %s21, [#allocation4], 128, 128, 8
    $region5: #{tpu_custom_call.1} parent=1 // pred_fallthru
      _
    // Predicated region
    $region6: #{tpu_custom_call.1} parent=1 // pred_check
      _
    $region7: #{tpu_custom_call.1} parent=1 // pred_check_branch
      %28 = sbr.rel (0) target = $region9
    $region8: #{tpu_custom_call.1} parent=1 // pred_region
      %s30 = ssub.s32 2048, 2048
      %31 = vsyncadd [#allocation7], %s30
      %s32 = sshll.u32 [#allocation6], 4
      %s33 = int_to_ptr.vmem [resolvable:$true] %s32
      %38 = dma.hbm_to_vmem [thread:$0]  %s1, 2048, %s33, [#allocation7], 128, 128, 8
    $region9: #{tpu_custom_call.1} parent=1 // pred_fallthru
      _
    // Predicated region
    $region10: #{tpu_custom_call.1} parent=1 // pred_check
      _
    $region11: #{tpu_custom_call.1} parent=1 // pred_check_branch
      %40 = sbr.rel (0) target = $region13
    $region12: #{tpu_custom_call.1} parent=1 // pred_region
      _
    $region13: #{tpu_custom_call.1} parent=1 // pred_fallthru
      _
    // Predicated region
    $region14: #{tpu_custom_call.1} parent=1 // pred_check
      _
    $region15: #{tpu_custom_call.1} parent=1 // pred_check_branch
      %42 = sbr.rel (0) target = $region17
    $region16: #{tpu_custom_call.1} parent=1 // pred_region
      %s44 = ssub.s32 2048, 2048
      %45 = vsyncadd [#allocation7], %s44
      %s46 = sshll.u32 [#allocation8], 4
      %s47 = int_to_ptr.vmem [resolvable:$true] %s46
      %52 = dma.hbm_to_vmem [thread:$0]  %s3, 2048, %s47, [#allocation7], 128, 128, 8
    $region17: #{tpu_custom_call.1} parent=1 // pred_fallthru
      _
    // Predicated region
    $region18: #{tpu_custom_call.1} parent=1 // pred_check
      _
    $region19: #{tpu_custom_call.1} parent=1 // pred_check_branch
      %54 = sbr.rel (0) target = $region21
    $region20: #{tpu_custom_call.1} parent=1 // pred_region
      _
    $region21: #{tpu_custom_call.1} parent=1 // pred_fallthru
      _
    // Predicated region
    $region22: #{tpu_custom_call.1} parent=1 // pred_check
      _
    $region23: #{tpu_custom_call.1} parent=1 // pred_check_branch
      %56 = sbr.rel (0) target = $region25
    $region24: #{tpu_custom_call.1} parent=1 // pred_region
      _
    $region25: #{tpu_custom_call.1} parent=1 // pred_fallthru
      _
    // Predicated region
    $region26: #{tpu_custom_call.1} parent=1 // pred_check
      _
    $region27: #{tpu_custom_call.1} parent=1 // pred_check_branch
      %58 = sbr.rel (0) target = $region29
    $region28: #{tpu_custom_call.1} parent=1 // pred_region
      _
    $region29: #{tpu_custom_call.1} parent=1 // pred_fallthru
      _
    // Predicated region
    $region30: #{tpu_custom_call.1} parent=1 // pred_check
      _
    $region31: #{tpu_custom_call.1} parent=1 // pred_check_branch
      %60 = sbr.rel (0) target = $region33
    $region32: #{tpu_custom_call.1} parent=1 // pred_region
      %61 = dma.done [#allocation4], 256
    $region33: #{tpu_custom_call.1} parent=1 // pred_fallthru
      _
    // Predicated region
    $region34: #{tpu_custom_call.1} parent=1 // pred_check
      _
    $region35: #{tpu_custom_call.1} parent=1 // pred_check_branch
      %63 = sbr.rel (0) target = $region37
    $region36: #{tpu_custom_call.1} parent=1 // pred_region
      %64 = dma.done [#allocation7], 2048
    $region37: #{tpu_custom_call.1} parent=1 // pred_fallthru
      _
    // Predicated region
    $region38: #{tpu_custom_call.1} parent=1 // pred_check
      _
    $region39: #{tpu_custom_call.1} parent=1 // pred_check_branch
      %66 = sbr.rel (0) target = $region41
    $region40: #{tpu_custom_call.1} parent=1 // pred_region
      %67 = dma.done [#allocation7], 2048
    $region41: #{tpu_custom_call.1} parent=1 // pred_fallthru
      _
    %p68 = scmp.eq.s32.totalorder 0, 0
    // Predicated region
    $region42: #{tpu_custom_call.1} parent=1 // pred_check
      %p69 = pneg %p68
    $region43: #{tpu_custom_call.1} parent=1 // pred_check_branch
      %71 = sbr.rel (%p69) target = $region45
    $region44: #{tpu_custom_call.1} parent=1 // pred_region
      %72 = vst [vmem:[#allocation2] sm:$0xff] 0.0
      %73 = vst [vmem:[#allocation2 + $0x8] sm:$0xff] 0.0
    $region45: #{tpu_custom_call.1} parent=1 // pred_fallthru
      _
    %v74 = vld [vmem:[#allocation3] sm:$0xff]
    %v75 = vld [vmem:[#allocation3 + $0x8] sm:$0xff]
    %v76 = vld [vmem:[#allocation6] sm:$0xff]
    %v77 = vld [vmem:[#allocation6 + $0x8] sm:$0xff]
    %v78 = vld [vmem:[#allocation6 + $0x10] sm:$0xff]
    %v79 = vld [vmem:[#allocation6 + $0x18] sm:$0xff]
    %v80 = vld [vmem:[#allocation6 + $0x20] sm:$0xff]
    %v81 = vld [vmem:[#allocation6 + $0x28] sm:$0xff]
    %v82 = vld [vmem:[#allocation6 + $0x30] sm:$0xff]
    %v83 = vld [vmem:[#allocation6 + $0x38] sm:$0xff]
    %v84 = vld [vmem:[#allocation6 + $0x40] sm:$0xff]
    %v85 = vld [vmem:[#allocation6 + $0x48] sm:$0xff]
    %v86 = vld [vmem:[#allocation6 + $0x50] sm:$0xff]
    %v87 = vld [vmem:[#allocation6 + $0x58] sm:$0xff]
    %v88 = vld [vmem:[#allocation6 + $0x60] sm:$0xff]
    %v89 = vld [vmem:[#allocation6 + $0x68] sm:$0xff]
    %v90 = vld [vmem:[#allocation6 + $0x70] sm:$0xff]
    %v91 = vld [vmem:[#allocation6 + $0x78] sm:$0xff]
    %v92 = vld [vmem:[%s2] sm:$0x1]
    %v94 = vlaneseq
    %v95 = vshrl.u32 %v94, 7
    %v96 = vsub.s32 0, %v95
    %v97 = vrot.slane %v92, %v96
    %99 = vmatprep.subr.mxu0 0.0
    %100 = vmatpush1.msra.mxu0 %v76
    %101 = vmatprep.subr.mxu0 0.0
    %102 = vmatpush1.msra.mxu0 %v77
    %103 = vmatprep.subr.mxu0 0.0
    %104 = vmatpush1.msra.mxu0 %v78
    %105 = vmatprep.subr.mxu0 0.0
    %106 = vmatpush1.msra.mxu0 %v79
    %107 = vmatprep.subr.mxu0 0.0
    %108 = vmatpush1.msra.mxu0 %v80
    %109 = vmatprep.subr.mxu0 0.0
    %110 = vmatpush1.msra.mxu0 %v81
    %111 = vmatprep.subr.mxu0 0.0
    %112 = vmatpush1.msra.mxu0 %v82
    %113 = vmatprep.subr.mxu0 0.0
    %114 = vmatpush1.msra.mxu0 %v83
    %115 = vmatprep.subr.mxu0 0.0
    %116 = vmatpush1.msra.mxu0 %v84
    %117 = vmatprep.subr.mxu0 0.0
    %118 = vmatpush1.msra.mxu0 %v85
    %119 = vmatprep.subr.mxu0 0.0
    %120 = vmatpush1.msra.mxu0 %v86
    %121 = vmatprep.subr.mxu0 0.0
    %122 = vmatpush1.msra.mxu0 %v87
    %123 = vmatprep.subr.mxu0 0.0
    %124 = vmatpush1.msra.mxu0 %v88
    %125 = vmatprep.subr.mxu0 0.0
    %126 = vmatpush1.msra.mxu0 %v89
    %127 = vmatprep.subr.mxu0 0.0
    %128 = vmatpush1.msra.mxu0 %v90
    %129 = vmatprep.subr.mxu0 0.0
    %130 = vmatpush1.msra.mxu0 %v91
    %131 = vmatprep.subr.mxu0 0.0
    %132 = vmatpush1.msra.mxu0 0.0
    %133 = vmatprep.subr.mxu0 0.0
    %134 = vmatpush1.msra.mxu0 0.0
    %135 = vmatprep.subr.mxu0 0.0
    %136 = vmatpush1.msra.mxu0 0.0
    %137 = vmatprep.subr.mxu0 0.0
    %138 = vmatpush1.msra.mxu0 0.0
    %139 = vmatprep.subr.mxu0 0.0
    %140 = vmatpush1.msra.mxu0 0.0
    %141 = vmatprep.subr.mxu0 0.0
    %142 = vmatpush1.msra.mxu0 0.0
    %143 = vmatprep.subr.mxu0 0.0
    %144 = vmatpush1.msra.mxu0 0.0
    %145 = vmatprep.subr.mxu0 0.0
    %146 = vmatpush1.msra.mxu0 0.0
    %147 = vmatprep.subr.mxu0 0.0
    %148 = vmatpush1.msra.mxu0 0.0
    %149 = vmatprep.subr.mxu0 0.0
    %150 = vmatpush1.msra.mxu0 0.0
    %151 = vmatprep.subr.mxu0 0.0
    %152 = vmatpush1.msra.mxu0 0.0
    %153 = vmatprep.subr.mxu0 0.0
    %154 = vmatpush1.msra.mxu0 0.0
    %155 = vmatprep.subr.mxu0 0.0
    %156 = vmatpush1.msra.mxu0 0.0
    %157 = vmatprep.subr.mxu0 0.0
    %158 = vmatpush1.msra.mxu0 0.0
    %159 = vmatprep.subr.mxu0 0.0
    %160 = vmatpush1.msra.mxu0 0.0
    %161 = vmatprep.subr.mxu0 0.0
    %162 = vmatpush1.msra.mxu0 0.0
    %163 = vmatprep.mubr.f32.mxu0 0.0
    %164 = vmatmul.mubr.f32.gmra.mrb[0].mxu0 %v74
    %v165 = vpop.f32.mrb[0].mxu0
    %v166 = vadd.f32 %v97, %v165
    %v167 = vpop.f32.mrb[0].mxu0
    %168 = vmatprep.mubr.f32.mxu0 0.0
    %169 = vmatmul.mubr.f32.gmra.mrb[0].mxu0 %v75
    %v170 = vpop.f32.mrb[0].mxu0
    %v171 = vadd.f32 %v97, %v170
    %v172 = vpop.f32.mrb[0].mxu0
    %173 = vdwg.mxu0
    %v174 = vmax.f32 %v166, 0.0
    %v175 = vmax.f32 %v171, 0.0
    %v176 = vld [vmem:[#allocation2] sm:$0xff]
    %v177 = vld [vmem:[#allocation2 + $0x8] sm:$0xff]
    %v178 = vld [vmem:[#allocation8] sm:$0xff]
    %v179 = vld [vmem:[#allocation8 + $0x8] sm:$0xff]
    %v180 = vld [vmem:[#allocation8 + $0x10] sm:$0xff]
    %v181 = vld [vmem:[#allocation8 + $0x18] sm:$0xff]
    %v182 = vld [vmem:[#allocation8 + $0x20] sm:$0xff]
    %v183 = vld [vmem:[#allocation8 + $0x28] sm:$0xff]
    %v184 = vld [vmem:[#allocation8 + $0x30] sm:$0xff]
    %v185 = vld [vmem:[#allocation8 + $0x38] sm:$0xff]
    %v186 = vld [vmem:[#allocation8 + $0x40] sm:$0xff]
    %v187 = vld [vmem:[#allocation8 + $0x48] sm:$0xff]
    %v188 = vld [vmem:[#allocation8 + $0x50] sm:$0xff]
    %v189 = vld [vmem:[#allocation8 + $0x58] sm:$0xff]
    %v190 = vld [vmem:[#allocation8 + $0x60] sm:$0xff]
    %v191 = vld [vmem:[#allocation8 + $0x68] sm:$0xff]
    %v192 = vld [vmem:[#allocation8 + $0x70] sm:$0xff]
    %v193 = vld [vmem:[#allocation8 + $0x78] sm:$0xff]
    %194 = vmatprep.subr.mxu0 0.0
    %195 = vmatpush1.msra.mxu0 %v178
    %196 = vmatprep.subr.mxu0 0.0
    %197 = vmatpush1.msra.mxu0 %v179
    %198 = vmatprep.subr.mxu0 0.0
    %199 = vmatpush1.msra.mxu0 %v180
    %200 = vmatprep.subr.mxu0 0.0
    %201 = vmatpush1.msra.mxu0 %v181
    %202 = vmatprep.subr.mxu0 0.0
    %203 = vmatpush1.msra.mxu0 %v182
    %204 = vmatprep.subr.mxu0 0.0
    %205 = vmatpush1.msra.mxu0 %v183
    %206 = vmatprep.subr.mxu0 0.0
    %207 = vmatpush1.msra.mxu0 %v184
    %208 = vmatprep.subr.mxu0 0.0
    %209 = vmatpush1.msra.mxu0 %v185
    %210 = vmatprep.subr.mxu0 0.0
    %211 = vmatpush1.msra.mxu0 %v186
    %212 = vmatprep.subr.mxu0 0.0
    %213 = vmatpush1.msra.mxu0 %v187
    %214 = vmatprep.subr.mxu0 0.0
    %215 = vmatpush1.msra.mxu0 %v188
    %216 = vmatprep.subr.mxu0 0.0
    %217 = vmatpush1.msra.mxu0 %v189
    %218 = vmatprep.subr.mxu0 0.0
    %219 = vmatpush1.msra.mxu0 %v190
    %220 = vmatprep.subr.mxu0 0.0
    %221 = vmatpush1.msra.mxu0 %v191
    %222 = vmatprep.subr.mxu0 0.0
    %223 = vmatpush1.msra.mxu0 %v192
    %224 = vmatprep.subr.mxu0 0.0
    %225 = vmatpush1.msra.mxu0 %v193
    %226 = vmatprep.subr.mxu0 0.0
    %227 = vmatpush1.msra.mxu0 0.0
    %228 = vmatprep.subr.mxu0 0.0
    %229 = vmatpush1.msra.mxu0 0.0
    %230 = vmatprep.subr.mxu0 0.0
    %231 = vmatpush1.msra.mxu0 0.0
    %232 = vmatprep.subr.mxu0 0.0
    %233 = vmatpush1.msra.mxu0 0.0
    %234 = vmatprep.subr.mxu0 0.0
    %235 = vmatpush1.msra.mxu0 0.0
    %236 = vmatprep.subr.mxu0 0.0
    %237 = vmatpush1.msra.mxu0 0.0
    %238 = vmatprep.subr.mxu0 0.0
    %239 = vmatpush1.msra.mxu0 0.0
    %240 = vmatprep.subr.mxu0 0.0
    %241 = vmatpush1.msra.mxu0 0.0
    %242 = vmatprep.subr.mxu0 0.0
    %243 = vmatpush1.msra.mxu0 0.0
    %244 = vmatprep.subr.mxu0 0.0
    %245 = vmatpush1.msra.mxu0 0.0
    %246 = vmatprep.subr.mxu0 0.0
    %247 = vmatpush1.msra.mxu0 0.0
    %248 = vmatprep.subr.mxu0 0.0
    %249 = vmatpush1.msra.mxu0 0.0
    %250 = vmatprep.subr.mxu0 0.0
    %251 = vmatpush1.msra.mxu0 0.0
    %252 = vmatprep.subr.mxu0 0.0
    %253 = vmatpush1.msra.mxu0 0.0
    %254 = vmatprep.subr.mxu0 0.0
    %255 = vmatpush1.msra.mxu0 0.0
    %256 = vmatprep.subr.mxu0 0.0
    %257 = vmatpush1.msra.mxu0 0.0
    %258 = vmatprep.mubr.f32.mxu0 0.0
    %259 = vmatmul.mubr.f32.gmra.mrb[0].mxu0 %v174
    %v260 = vpop.f32.mrb[0].mxu0
    %v261 = vadd.f32 0.0, %v260
    %v262 = vpop.f32.mrb[0].mxu0
    %263 = vmatprep.mubr.f32.mxu0 0.0
    %264 = vmatmul.mubr.f32.gmra.mrb[0].mxu0 %v175
    %v265 = vpop.f32.mrb[0].mxu0
    %v266 = vadd.f32 0.0, %v265
    %v267 = vpop.f32.mrb[0].mxu0
    %268 = vdwg.mxu0
    %v269 = vadd.f32 %v176, %v261
    %v270 = vadd.f32 %v177, %v266
    %271 = vst [vmem:[#allocation2] sm:$0xff] %v269
    %272 = vst [vmem:[#allocation2 + $0x8] sm:$0xff] %v270
    // Predicated region
    $region46: #{tpu_custom_call.1} parent=1 // pred_check
      %p273 = pneg %p68
    $region47: #{tpu_custom_call.1} parent=1 // pred_check_branch
      %275 = sbr.rel (%p273) target = $region49
    $region48: #{tpu_custom_call.1} parent=1 // pred_region
      %v276 = vld [vmem:[#allocation2] sm:$0xff]
      %v277 = vld [vmem:[#allocation2 + $0x8] sm:$0xff]
      %v278 = vld [vmem:[%s4] sm:$0x1]
      %v280 = vlaneseq
      %v281 = vshrl.u32 %v280, 7
      %v282 = vsub.s32 0, %v281
      %v283 = vrot.slane %v278, %v282
      %v285 = vadd.f32 %v276, %v283
      %v286 = vadd.f32 %v277, %v283
      %v287 = vadd.f32 %v285, %v74
      %v288 = vadd.f32 %v286, %v75
      %289 = vadd.xlane.f32.xlu0 %v287
      %v290 = vpop.xlane.xlu0 %289
      %291 = vadd.xlane.f32.xlu0 %v288
      %v292 = vpop.xlane.xlu0 %291
      %v293 = vmul.f32 %v290, 0.03125
      %v294 = vmul.f32 %v292, 0.03125
      %v295 = vsub.f32 %v287, %v293
      %v296 = vsub.f32 %v288, %v294
      %v297 = vmul.f32 %v295, %v295
      %v298 = vmul.f32 %v296, %v296
      %299 = vadd.xlane.f32.xlu0 %v297
      %v300 = vpop.xlane.xlu0 %299
      %301 = vadd.xlane.f32.xlu0 %v298
      %v302 = vpop.xlane.xlu0 %301
      %v303 = vmul.f32 %v293, 96.0
      %v304 = vmul.f32 %v294, 96.0
      %v305 = vmul.f32 %v303, %v293
      %v306 = vmul.f32 %v304, %v294
      %v307 = vsub.f32 %v300, %v305
      %v308 = vsub.f32 %v302, %v306
      %v309 = vmul.f32 %v307, 0.03125
      %v310 = vmul.f32 %v308, 0.03125
      %v311 = vadd.f32 %v309, 1e-05
      %v312 = vadd.f32 %v310, 1e-05
      %v313 = vrsqrt.pop %v311
      %v314 = vrsqrt.pop %v312
      %v315 = vmul.f32 %v295, %v313
      %v316 = vmul.f32 %v296, %v314
      %v317 = vld [vmem:[%s5] sm:$0x1]
      %v319 = vlaneseq
      %v320 = vshrl.u32 %v319, 7
      %v321 = vsub.s32 0, %v320
      %v322 = vrot.slane %v317, %v321
      %v324 = vmul.f32 %v315, %v322
      %v325 = vmul.f32 %v316, %v322
      %v326 = vld [vmem:[%s6] sm:$0x1]
      %v328 = vlaneseq
      %v329 = vshrl.u32 %v328, 7
      %v330 = vsub.s32 0, %v329
      %v331 = vrot.slane %v326, %v330
      %v333 = vadd.f32 %v324, %v331
      %v334 = vadd.f32 %v325, %v331
      %335 = vst [vmem:[#allocation9] sm:$0xff] %v333
      %336 = vst [vmem:[#allocation9 + $0x8] sm:$0xff] %v334
    $region49: #{tpu_custom_call.1} parent=1 // pred_fallthru
      _
    // Predicated region
    $region50: #{tpu_custom_call.1} parent=1 // pred_check
      _
    $region51: #{tpu_custom_call.1} parent=1 // pred_check_branch
      %338 = sbr.rel (0) target = $region53
    $region52: #{tpu_custom_call.1} parent=1 // pred_region
      %s340 = ssub.s32 256, 256
      %341 = vsyncadd [#allocation5], %s340
      %s342 = sshll.u32 [#allocation9], 4
      %s343 = int_to_ptr.vmem [resolvable:$true] %s342
      %348 = dma.vmem_to_hbm [thread:$0]  %s343, 256, %s7, [#allocation5], 128, 128, 8
    $region53: #{tpu_custom_call.1} parent=1 // pred_fallthru
      _
    // Predicated region
    $region54: #{tpu_custom_call.1} parent=1 // pred_check
      _
    $region55: #{tpu_custom_call.1} parent=1 // pred_check_branch
      %350 = sbr.rel (0) target = $region57
    $region56: #{tpu_custom_call.1} parent=1 // pred_region
      %351 = dma.done [#allocation5], 256
    $region57: #{tpu_custom_call.1} parent=1 // pred_fallthru
      _
    %352 = vsyncpa [#allocation4], 1
    %353 = vsyncpa [#allocation7], 1
    %354 = vsyncpa [#allocation5], 1

// kernel: tpu_custom_call.1
$region0: #{tpu_custom_call.1}
  #allocation0 [shape = 'u32[]', space=smem, size = 0x4, offset = 0x4, fixed_abs, tag = 'smem constant byte address 0x4 - core index']
  #allocation1 [shape = 'u32[144,128]{1,0:T(1,128)}', space=vmem, size = 0x12000, scoped, tag = 'internal scratch']
  #allocation2 [shape = 'f32[16,128]{1,0:T(8,128)}', space=vmem, size = 0x2000, scoped, tag = 'scratch operand']
  %s0 = inlined_call_operand.hbm [shape: f32[16,128], index: 0, kind: input, shape index: {}]
  %s1 = inlined_call_operand.hbm [shape: f32[128,128], index: 1, kind: input, shape index: {}]
  %s2 = inlined_call_operand.vmem [shape: f32[1,128], index: 2, kind: input, shape index: {}]
  %s3 = inlined_call_operand.hbm [shape: f32[128,128], index: 3, kind: input, shape index: {}]
  %s4 = inlined_call_operand.vmem [shape: f32[1,128], index: 4, kind: input, shape index: {}]
  %s5 = inlined_call_operand.vmem [shape: f32[1,128], index: 5, kind: input, shape index: {}]
  %s6 = inlined_call_operand.vmem [shape: f32[1,128], index: 6, kind: input, shape index: {}]
  %s7 = inlined_call_operand.hbm [shape: f32[16,128], index: 7, kind: output, shape index: {}]
  %s8 = sld [smem:[#allocation0]]
  $region58: #{tpu_custom_call.1} parent=0
    _
  %s10 = ssub.s32 1, %s8
  %s11 = scalar_select 0, %s10, %s8
  $region1: #{tpu_custom_call.1} parent=0
    #allocation3 [shape = 'u8[8192]{0}', space=vmem, size = 0x2000, scoped, tag = 'input window, operand 0, single buffered']
    #allocation4 [shape = 's32[1]{0}', space=sflag, size = 0x4, scoped, tag = 'scoped memory for tpu_custom_call.1']
    #allocation5 [shape = 's32[1]{0}', space=sflag, size = 0x4, scoped, tag = 'scoped memory for tpu_custom_call.1']
    #allocation6 [shape = 'u8[65536]{0}', space=vmem, size = 0x10000, scoped, tag = 'input window, operand 1, single buffered']
    #allocation7 [shape = 's32[1]{0}', space=sflag, size = 0x4, scoped, tag = 'scoped memory for tpu_custom_call.1']
    #allocation8 [shape = 'u8[65536]{0}', space=vmem, size = 0x10000, scoped, tag = 'input window, operand 3, single buffered']
    #allocation9 [shape = 'u8[8192]{0}', space=vmem, size = 0x2000, scoped, tag = 'output window, operand 0, single buffered']
    %12 = vsyncpa [#allocation4], 0
    %13 = vsyncpa [#allocation7], 0
    %14 = vsyncpa [#allocation5], 0
    // Predicated region
    $region2: #{tpu_custom_call.1} parent=1 // pred_check
      _
    $region3: #{tpu_custom_call.1} parent=1 // pred_check_branch
      %16 = sbr.rel (0) target = $region5
    $region4: #{tpu_custom_call.1} parent=1 // pred_region
      %s18 = ssub.s32 256, 256
      %19 = vsyncadd [#allocation4], %s18
      %s20 = sshll.u32 [#allocation3], 4
      %s21 = int_to_ptr.vmem [resolvable:$true] %s20
      %26 = dma.hbm_to_vmem [thread:$0]  %s0, 256, %s21, [#allocation4], 128, 128, 8
    $region5: #{tpu_custom_call.1} parent=1 // pred_fallthru
      _
    // Predicated region
    $region6: #{tpu_custom_call.1} parent=1 // pred_check
      _
    $region7: #{tpu_custom_call.1} parent=1 // pred_check_branch
      %28 = sbr.rel (0) target = $region9
    $region8: #{tpu_custom_call.1} parent=1 // pred_region
      %s30 = ssub.s32 2048, 2048
      %31 = vsyncadd [#allocation7], %s30
      %s32 = sshll.u32 [#allocation6], 4
      %s33 = int_to_ptr.vmem [resolvable:$true] %s32
      %38 = dma.hbm_to_vmem [thread:$0]  %s1, 2048, %s33, [#allocation7], 128, 128, 8
    $region9: #{tpu_custom_call.1} parent=1 // pred_fallthru
      _
    // Predicated region
    $region10: #{tpu_custom_call.1} parent=1 // pred_check
      _
    $region11: #{tpu_custom_call.1} parent=1 // pred_check_branch
      %40 = sbr.rel (0) target = $region13
    $region12: #{tpu_custom_call.1} parent=1 // pred_region
      _
    $region13: #{tpu_custom_call.1} parent=1 // pred_fallthru
      _
    // Predicated region
    $region14: #{tpu_custom_call.1} parent=1 // pred_check
      _
    $region15: #{tpu_custom_call.1} parent=1 // pred_check_branch
      %42 = sbr.rel (0) target = $region17
    $region16: #{tpu_custom_call.1} parent=1 // pred_region
      %s44 = ssub.s32 2048, 2048
      %45 = vsyncadd [#allocation7], %s44
      %s46 = sshll.u32 [#allocation8], 4
      %s47 = int_to_ptr.vmem [resolvable:$true] %s46
      %52 = dma.hbm_to_vmem [thread:$0]  %s3, 2048, %s47, [#allocation7], 128, 128, 8
    $region17: #{tpu_custom_call.1} parent=1 // pred_fallthru
      _
    // Predicated region
    $region18: #{tpu_custom_call.1} parent=1 // pred_check
      _
    $region19: #{tpu_custom_call.1} parent=1 // pred_check_branch
      %54 = sbr.rel (0) target = $region21
    $region20: #{tpu_custom_call.1} parent=1 // pred_region
      _
    $region21: #{tpu_custom_call.1} parent=1 // pred_fallthru
      _
    // Predicated region
    $region22: #{tpu_custom_call.1} parent=1 // pred_check
      _
    $region23: #{tpu_custom_call.1} parent=1 // pred_check_branch
      %56 = sbr.rel (0) target = $region25
    $region24: #{tpu_custom_call.1} parent=1 // pred_region
      _
    $region25: #{tpu_custom_call.1} parent=1 // pred_fallthru
      _
    // Predicated region
    $region26: #{tpu_custom_call.1} parent=1 // pred_check
      _
    $region27: #{tpu_custom_call.1} parent=1 // pred_check_branch
      %58 = sbr.rel (0) target = $region29
    $region28: #{tpu_custom_call.1} parent=1 // pred_region
      _
    $region29: #{tpu_custom_call.1} parent=1 // pred_fallthru
      _
    // Predicated region
    $region30: #{tpu_custom_call.1} parent=1 // pred_check
      _
    $region31: #{tpu_custom_call.1} parent=1 // pred_check_branch
      %60 = sbr.rel (0) target = $region33
    $region32: #{tpu_custom_call.1} parent=1 // pred_region
      %61 = dma.done [#allocation4], 256
    $region33: #{tpu_custom_call.1} parent=1 // pred_fallthru
      _
    // Predicated region
    $region34: #{tpu_custom_call.1} parent=1 // pred_check
      _
    $region35: #{tpu_custom_call.1} parent=1 // pred_check_branch
      %63 = sbr.rel (0) target = $region37
    $region36: #{tpu_custom_call.1} parent=1 // pred_region
      %64 = dma.done [#allocation7], 2048
    $region37: #{tpu_custom_call.1} parent=1 // pred_fallthru
      _
    // Predicated region
    $region38: #{tpu_custom_call.1} parent=1 // pred_check
      _
    $region39: #{tpu_custom_call.1} parent=1 // pred_check_branch
      %66 = sbr.rel (0) target = $region41
    $region40: #{tpu_custom_call.1} parent=1 // pred_region
      %67 = dma.done [#allocation7], 2048
    $region41: #{tpu_custom_call.1} parent=1 // pred_fallthru
      _
    %p68 = scmp.eq.s32.totalorder 0, 0
    // Predicated region
    $region42: #{tpu_custom_call.1} parent=1 // pred_check
      %p69 = pneg %p68
    $region43: #{tpu_custom_call.1} parent=1 // pred_check_branch
      %71 = sbr.rel (%p69) target = $region45
    $region44: #{tpu_custom_call.1} parent=1 // pred_region
      %72 = vst [vmem:[#allocation2] sm:$0xff] 0.0
      %73 = vst [vmem:[#allocation2 + $0x8] sm:$0xff] 0.0
    $region45: #{tpu_custom_call.1} parent=1 // pred_fallthru
      _
    %v74 = vld [vmem:[#allocation3] sm:$0xff]
    %v75 = vld [vmem:[#allocation3 + $0x8] sm:$0xff]
    %v76 = vld [vmem:[#allocation6] sm:$0xff]
    %v77 = vld [vmem:[#allocation6 + $0x8] sm:$0xff]
    %v78 = vld [vmem:[#allocation6 + $0x10] sm:$0xff]
    %v79 = vld [vmem:[#allocation6 + $0x18] sm:$0xff]
    %v80 = vld [vmem:[#allocation6 + $0x20] sm:$0xff]
    %v81 = vld [vmem:[#allocation6 + $0x28] sm:$0xff]
    %v82 = vld [vmem:[#allocation6 + $0x30] sm:$0xff]
    %v83 = vld [vmem:[#allocation6 + $0x38] sm:$0xff]
    %v84 = vld [vmem:[#allocation6 + $0x40] sm:$0xff]
    %v85 = vld [vmem:[#allocation6 + $0x48] sm:$0xff]
    %v86 = vld [vmem:[#allocation6 + $0x50] sm:$0xff]
    %v87 = vld [vmem:[#allocation6 + $0x58] sm:$0xff]
    %v88 = vld [vmem:[#allocation6 + $0x60] sm:$0xff]
    %v89 = vld [vmem:[#allocation6 + $0x68] sm:$0xff]
    %v90 = vld [vmem:[#allocation6 + $0x70] sm:$0xff]
    %v91 = vld [vmem:[#allocation6 + $0x78] sm:$0xff]
    %v92 = vld [vmem:[%s2] sm:$0x1]
    %v94 = vlaneseq
    %v95 = vshrl.u32 %v94, 7
    %v96 = vsub.s32 0, %v95
    %v97 = vrot.slane %v92, %v96
    %99 = vmatprep.subr.mxu0 0.0
    %100 = vmatpush1.msra.mxu0 %v76
    %101 = vmatprep.subr.mxu0 0.0
    %102 = vmatpush1.msra.mxu0 %v77
    %103 = vmatprep.subr.mxu0 0.0
    %104 = vmatpush1.msra.mxu0 %v78
    %105 = vmatprep.subr.mxu0 0.0
    %106 = vmatpush1.msra.mxu0 %v79
    %107 = vmatprep.subr.mxu0 0.0
    %108 = vmatpush1.msra.mxu0 %v80
    %109 = vmatprep.subr.mxu0 0.0
    %110 = vmatpush1.msra.mxu0 %v81
    %111 = vmatprep.subr.mxu0 0.0
    %112 = vmatpush1.msra.mxu0 %v82
    %113 = vmatprep.subr.mxu0 0.0
    %114 = vmatpush1.msra.mxu0 %v83
    %115 = vmatprep.subr.mxu0 0.0
    %116 = vmatpush1.msra.mxu0 %v84
    %117 = vmatprep.subr.mxu0 0.0
    %118 = vmatpush1.msra.mxu0 %v85
    %119 = vmatprep.subr.mxu0 0.0
    %120 = vmatpush1.msra.mxu0 %v86
    %121 = vmatprep.subr.mxu0 0.0
    %122 = vmatpush1.msra.mxu0 %v87
    %123 = vmatprep.subr.mxu0 0.0
    %124 = vmatpush1.msra.mxu0 %v88
    %125 = vmatprep.subr.mxu0 0.0
    %126 = vmatpush1.msra.mxu0 %v89
    %127 = vmatprep.subr.mxu0 0.0
    %128 = vmatpush1.msra.mxu0 %v90
    %129 = vmatprep.subr.mxu0 0.0
    %130 = vmatpush1.msra.mxu0 %v91
    %131 = vmatprep.subr.mxu0 0.0
    %132 = vmatpush1.msra.mxu0 0.0
    %133 = vmatprep.subr.mxu0 0.0
    %134 = vmatpush1.msra.mxu0 0.0
    %135 = vmatprep.subr.mxu0 0.0
    %136 = vmatpush1.msra.mxu0 0.0
    %137 = vmatprep.subr.mxu0 0.0
    %138 = vmatpush1.msra.mxu0 0.0
    %139 = vmatprep.subr.mxu0 0.0
    %140 = vmatpush1.msra.mxu0 0.0
    %141 = vmatprep.subr.mxu0 0.0
    %142 = vmatpush1.msra.mxu0 0.0
    %143 = vmatprep.subr.mxu0 0.0
    %144 = vmatpush1.msra.mxu0 0.0
    %145 = vmatprep.subr.mxu0 0.0
    %146 = vmatpush1.msra.mxu0 0.0
    %147 = vmatprep.subr.mxu0 0.0
    %148 = vmatpush1.msra.mxu0 0.0
    %149 = vmatprep.subr.mxu0 0.0
    %150 = vmatpush1.msra.mxu0 0.0
    %151 = vmatprep.subr.mxu0 0.0
    %152 = vmatpush1.msra.mxu0 0.0
    %153 = vmatprep.subr.mxu0 0.0
    %154 = vmatpush1.msra.mxu0 0.0
    %155 = vmatprep.subr.mxu0 0.0
    %156 = vmatpush1.msra.mxu0 0.0
    %157 = vmatprep.subr.mxu0 0.0
    %158 = vmatpush1.msra.mxu0 0.0
    %159 = vmatprep.subr.mxu0 0.0
    %160 = vmatpush1.msra.mxu0 0.0
    %161 = vmatprep.subr.mxu0 0.0
    %162 = vmatpush1.msra.mxu0 0.0
    %163 = vmatprep.mubr.f32.mxu0 0.0
    %164 = vmatmul.mubr.f32.gmra.mrb[0].mxu0 %v74
    %v165 = vpop.f32.mrb[0].mxu0
    %v166 = vadd.f32 %v97, %v165
    %v167 = vpop.f32.mrb[0].mxu0
    %168 = vmatprep.mubr.f32.mxu0 0.0
    %169 = vmatmul.mubr.f32.gmra.mrb[0].mxu0 %v75
    %v170 = vpop.f32.mrb[0].mxu0
    %v171 = vadd.f32 %v97, %v170
    %v172 = vpop.f32.mrb[0].mxu0
    %173 = vdwg.mxu0
    %v174 = vmax.f32 %v166, 0.0
    %v175 = vmax.f32 %v171, 0.0
    %v176 = vld [vmem:[#allocation2] sm:$0xff]
    %v177 = vld [vmem:[#allocation2 + $0x8] sm:$0xff]
    %v178 = vld [vmem:[#allocation8] sm:$0xff]
    %v179 = vld [vmem:[#allocation8 + $0x8] sm:$0xff]
    %v180 = vld [vmem:[#allocation8 + $0x10] sm:$0xff]
    %v181 = vld [vmem:[#allocation8 + $0x18] sm:$0xff]
    %v182 = vld [vmem:[#allocation8 + $0x20] sm:$0xff]
    %v183 = vld [vmem:[#allocation8 + $0x28] sm:$0xff]
    %v184 = vld [vmem:[#allocation8 + $0x30] sm:$0xff]
    %v185 = vld [vmem:[#allocation8 + $0x38] sm:$0xff]
    %v186 = vld [vmem:[#allocation8 + $0x40] sm:$0xff]
    %v187 = vld [vmem:[#allocation8 + $0x48] sm:$0xff]
    %v188 = vld [vmem:[#allocation8 + $0x50] sm:$0xff]
    %v189 = vld [vmem:[#allocation8 + $0x58] sm:$0xff]
    %v190 = vld [vmem:[#allocation8 + $0x60] sm:$0xff]
    %v191 = vld [vmem:[#allocation8 + $0x68] sm:$0xff]
    %v192 = vld [vmem:[#allocation8 + $0x70] sm:$0xff]
    %v193 = vld [vmem:[#allocation8 + $0x78] sm:$0xff]
    %194 = vmatprep.subr.mxu0 0.0
    %195 = vmatpush1.msra.mxu0 %v178
    %196 = vmatprep.subr.mxu0 0.0
    %197 = vmatpush1.msra.mxu0 %v179
    %198 = vmatprep.subr.mxu0 0.0
    %199 = vmatpush1.msra.mxu0 %v180
    %200 = vmatprep.subr.mxu0 0.0
    %201 = vmatpush1.msra.mxu0 %v181
    %202 = vmatprep.subr.mxu0 0.0
    %203 = vmatpush1.msra.mxu0 %v182
    %204 = vmatprep.subr.mxu0 0.0
    %205 = vmatpush1.msra.mxu0 %v183
    %206 = vmatprep.subr.mxu0 0.0
    %207 = vmatpush1.msra.mxu0 %v184
    %208 = vmatprep.subr.mxu0 0.0
    %209 = vmatpush1.msra.mxu0 %v185
    %210 = vmatprep.subr.mxu0 0.0
    %211 = vmatpush1.msra.mxu0 %v186
    %212 = vmatprep.subr.mxu0 0.0
    %213 = vmatpush1.msra.mxu0 %v187
    %214 = vmatprep.subr.mxu0 0.0
    %215 = vmatpush1.msra.mxu0 %v188
    %216 = vmatprep.subr.mxu0 0.0
    %217 = vmatpush1.msra.mxu0 %v189
    %218 = vmatprep.subr.mxu0 0.0
    %219 = vmatpush1.msra.mxu0 %v190
    %220 = vmatprep.subr.mxu0 0.0
    %221 = vmatpush1.msra.mxu0 %v191
    %222 = vmatprep.subr.mxu0 0.0
    %223 = vmatpush1.msra.mxu0 %v192
    %224 = vmatprep.subr.mxu0 0.0
    %225 = vmatpush1.msra.mxu0 %v193
    %226 = vmatprep.subr.mxu0 0.0
    %227 = vmatpush1.msra.mxu0 0.0
    %228 = vmatprep.subr.mxu0 0.0
    %229 = vmatpush1.msra.mxu0 0.0
    %230 = vmatprep.subr.mxu0 0.0
    %231 = vmatpush1.msra.mxu0 0.0
    %232 = vmatprep.subr.mxu0 0.0
    %233 = vmatpush1.msra.mxu0 0.0
    %234 = vmatprep.subr.mxu0 0.0
    %235 = vmatpush1.msra.mxu0 0.0
    %236 = vmatprep.subr.mxu0 0.0
    %237 = vmatpush1.msra.mxu0 0.0
    %238 = vmatprep.subr.mxu0 0.0
    %239 = vmatpush1.msra.mxu0 0.0
    %240 = vmatprep.subr.mxu0 0.0
    %241 = vmatpush1.msra.mxu0 0.0
    %242 = vmatprep.subr.mxu0 0.0
    %243 = vmatpush1.msra.mxu0 0.0
    %244 = vmatprep.subr.mxu0 0.0
    %245 = vmatpush1.msra.mxu0 0.0
    %246 = vmatprep.subr.mxu0 0.0
    %247 = vmatpush1.msra.mxu0 0.0
    %248 = vmatprep.subr.mxu0 0.0
    %249 = vmatpush1.msra.mxu0 0.0
    %250 = vmatprep.subr.mxu0 0.0
    %251 = vmatpush1.msra.mxu0 0.0
    %252 = vmatprep.subr.mxu0 0.0
    %253 = vmatpush1.msra.mxu0 0.0
    %254 = vmatprep.subr.mxu0 0.0
    %255 = vmatpush1.msra.mxu0 0.0
    %256 = vmatprep.subr.mxu0 0.0
    %257 = vmatpush1.msra.mxu0 0.0
    %258 = vmatprep.mubr.f32.mxu0 0.0
    %259 = vmatmul.mubr.f32.gmra.mrb[0].mxu0 %v174
    %v260 = vpop.f32.mrb[0].mxu0
    %v261 = vadd.f32 0.0, %v260
    %v262 = vpop.f32.mrb[0].mxu0
    %263 = vmatprep.mubr.f32.mxu0 0.0
    %264 = vmatmul.mubr.f32.gmra.mrb[0].mxu0 %v175
    %v265 = vpop.f32.mrb[0].mxu0
    %v266 = vadd.f32 0.0, %v265
    %v267 = vpop.f32.mrb[0].mxu0
    %268 = vdwg.mxu0
    %v269 = vadd.f32 %v176, %v261
    %v270 = vadd.f32 %v177, %v266
    %271 = vst [vmem:[#allocation2] sm:$0xff] %v269
    %272 = vst [vmem:[#allocation2 + $0x8] sm:$0xff] %v270
    // Predicated region
    $region46: #{tpu_custom_call.1} parent=1 // pred_check
      %p273 = pneg %p68
    $region47: #{tpu_custom_call.1} parent=1 // pred_check_branch
      %275 = sbr.rel (%p273) target = $region49
    $region48: #{tpu_custom_call.1} parent=1 // pred_region
      %v276 = vld [vmem:[#allocation2] sm:$0xff]
      %v277 = vld [vmem:[#allocation2 + $0x8] sm:$0xff]
      %v278 = vld [vmem:[%s4] sm:$0x1]
      %v280 = vlaneseq
      %v281 = vshrl.u32 %v280, 7
      %v282 = vsub.s32 0, %v281
      %v283 = vrot.slane %v278, %v282
      %v285 = vadd.f32 %v276, %v283
      %v286 = vadd.f32 %v277, %v283
      %v287 = vadd.f32 %v285, %v74
      %v288 = vadd.f32 %v286, %v75
      %289 = vadd.xlane.f32.xlu0 %v287
      %v290 = vpop.xlane.xlu0 %289
      %291 = vadd.xlane.f32.xlu0 %v288
      %v292 = vpop.xlane.xlu0 %291
      %v293 = vmul.f32 %v290, 0.03125
      %v294 = vmul.f32 %v292, 0.03125
      %v295 = vsub.f32 %v287, %v293
      %v296 = vsub.f32 %v288, %v294
      %v297 = vmul.f32 %v295, %v295
      %v298 = vmul.f32 %v296, %v296
      %299 = vadd.xlane.f32.xlu0 %v297
      %v300 = vpop.xlane.xlu0 %299
      %301 = vadd.xlane.f32.xlu0 %v298
      %v302 = vpop.xlane.xlu0 %301
      %v303 = vmul.f32 %v293, 96.0
      %v304 = vmul.f32 %v294, 96.0
      %v305 = vmul.f32 %v303, %v293
      %v306 = vmul.f32 %v304, %v294
      %v307 = vsub.f32 %v300, %v305
      %v308 = vsub.f32 %v302, %v306
      %v309 = vmul.f32 %v307, 0.03125
      %v310 = vmul.f32 %v308, 0.03125
      %v311 = vadd.f32 %v309, 1e-05
      %v312 = vadd.f32 %v310, 1e-05
      %v313 = vrsqrt.pop %v311
      %v314 = vrsqrt.pop %v312
      %v315 = vmul.f32 %v295, %v313
      %v316 = vmul.f32 %v296, %v314
      %v317 = vld [vmem:[%s5] sm:$0x1]
      %v319 = vlaneseq
      %v320 = vshrl.u32 %v319, 7
      %v321 = vsub.s32 0, %v320
      %v322 = vrot.slane %v317, %v321
      %v324 = vmul.f32 %v315, %v322
      %v325 = vmul.f32 %v316, %v322
      %v326 = vld [vmem:[%s6] sm:$0x1]
      %v328 = vlaneseq
      %v329 = vshrl.u32 %v328, 7
      %v330 = vsub.s32 0, %v329
      %v331 = vrot.slane %v326, %v330
      %v333 = vadd.f32 %v324, %v331
      %v334 = vadd.f32 %v325, %v331
      %335 = vst [vmem:[#allocation9] sm:$0xff] %v333
      %336 = vst [vmem:[#allocation9 + $0x8] sm:$0xff] %v334
    $region49: #{tpu_custom_call.1} parent=1 // pred_fallthru
      _
    // Predicated region
    $region50: #{tpu_custom_call.1} parent=1 // pred_check
      _
    $region51: #{tpu_custom_call.1} parent=1 // pred_check_branch
      %338 = sbr.rel (0) target = $region53
    $region52: #{tpu_custom_call.1} parent=1 // pred_region
      %s340 = ssub.s32 256, 256
      %341 = vsyncadd [#allocation5], %s340
      %s342 = sshll.u32 [#allocation9], 4
      %s343 = int_to_ptr.vmem [resolvable:$true] %s342
      %348 = dma.vmem_to_hbm [thread:$0]  %s343, 256, %s7, [#allocation5], 128, 128, 8
    $region53: #{tpu_custom_call.1} parent=1 // pred_fallthru
      _
    // Predicated region
    $region54: #{tpu_custom_call.1} parent=1 // pred_check
      _
    $region55: #{tpu_custom_call.1} parent=1 // pred_check_branch
      %350 = sbr.rel (0) target = $region57
    $region56: #{tpu_custom_call.1} parent=1 // pred_region
      %351 = dma.done [#allocation5], 256
    $region57: #{tpu_custom_call.1} parent=1 // pred_fallthru
      _
    %352 = vsyncpa [#allocation4], 1
    %353 = vsyncpa [#allocation7], 1
    %354 = vsyncpa [#allocation5], 1

</llo_original>
